<compile_context>
chip_gen: v7x
topology: tpu7x:2x2x1
jax: 0.10.0
libtpu: 0.0.40
codegen_flags: <defaults>
</compile_context>

<pallas_src>
import jax
import jax.numpy as jnp
from jax import lax
from jax.experimental import pallas as pl
from jax.experimental.pallas import tpu as pltpu


def _rdb_conv_kernel(x_ref, xt_ref, xb_ref, w_ref, b_ref, o_ref):
    # x_ref : (1, TH, W, Cin)    current row-block of the (unpadded) image
    # xt_ref: (1, 1,  W, Cin)    row above the block (index clamped at top edge)
    # xb_ref: (1, 1,  W, Cin)    row below the block (index clamped at bottom edge)
    # w_ref : (3, 3*Cin, C_pad)  per-kh im2col weights; conv at cols [Cin:Cin+Cout],
    #                            identity(Cin) at [1, Cin:2*Cin, 0:Cin] (passthrough)
    # b_ref : (1, C_pad)         bias at cols [Cin:Cin+Cout], zeros elsewhere
    # o_ref : (1, TH, W, C_pad)  lane-dense output row-block
    h = pl.program_id(1)
    n_h = pl.num_programs(1)
    TH, W, Cin = x_ref.shape[1], x_ref.shape[2], x_ref.shape[3]
    C_pad = o_ref.shape[3]
    cdt = w_ref.dtype                                    # MXU compute dtype (bf16)

    # Haloed (TH+2, W, Cin) slab; zero the halo rows at the image edges.
    keep_top = (h > 0).astype(jnp.float32)
    keep_bot = (h < n_h - 1).astype(jnp.float32)
    top = (xt_ref[0, 0] * keep_top).astype(cdt)          # (W, Cin)
    bot = (xb_ref[0, 0] * keep_bot).astype(cdt)          # (W, Cin)
    main = x_ref[0].astype(cdt)                          # (TH, W, Cin)
    slab = jnp.concatenate([top[None], main, bot[None]], axis=0)   # (TH+2, W, Cin)

    # kw-shifted copies (zero columns at the left/right edges) -> one
    # (TH+2, W, 3*Cin) buffer; the kh shifts below are free leading-axis slices.
    zc = jnp.zeros((TH + 2, 1, Cin), cdt)
    left = jnp.concatenate([zc, slab[:, : W - 1, :]], axis=1)      # x[.., w-1, ..]
    right = jnp.concatenate([slab[:, 1:, :], zc], axis=1)          # x[.., w+1, ..]
    kwcat = jnp.concatenate([left, slab, right], axis=-1)          # (TH+2, W, 3*Cin)

    # Three accumulated MXU matmuls, K = 3*Cin, N = C_pad (multiple of 128).
    # TODO(synk): if W % 8 != 0 the reshape forces a relayout; pad W to a
    # multiple of 8 in the wrapper if that case ever matters.
    acc = jnp.zeros((TH * W, C_pad), jnp.float32)
    for kh in range(3):
        patches = kwcat[kh:kh + TH].reshape(TH * W, 3 * Cin)
        acc += jnp.dot(patches, w_ref[kh], preferred_element_type=jnp.float32)

    # Bias + ReLU only on the conv/padding lanes (>= Cin); passthrough lanes
    # (the identity columns) stay linear so the concat branch is not clipped.
    y = acc + b_ref[...]
    lane = lax.broadcasted_iota(jnp.int32, y.shape, 1)
    y = jnp.where(lane >= Cin, jnp.maximum(y, 0.0), y)

    o_ref[...] = y.reshape(1, TH, W, C_pad).astype(o_ref.dtype)


def _vmem_limit_bytes():
    # Generation-aware budget: ~5/8 of per-core VMEM, capped at 96 MiB
    # (v5e/v6e have 128 MiB physical, v7x only 64 MiB per TensorCore).
    cap = 64 * 1024 * 1024
    try:
        info = pltpu.get_tpu_info()
        cap = int(getattr(info, "vmem_capacity_bytes", cap) or cap)
    except Exception:
        pass
    return min(int(cap * 5 // 8), 96 * 1024 * 1024)


def _pick_tile_h(H, W, Cin, C_pad, budget_bytes, in_bytes, mxu_bytes):
    cands = sorted(
        {t for t in (H, 256, 128, 64, 32, 16, 8, 4, 2, 1)
         if 0 < t <= H and H % t == 0},
        reverse=True)

    def est(t):
        f32 = 4
        xin = 2 * t * W * Cin * in_bytes            # double-buffered main block
        halo = 4 * W * Cin * in_bytes               # two 1-row halos (x2 buffers)
        out = 2 * t * W * C_pad * f32               # double-buffered output block
        slab = 3 * (t + 2) * W * Cin * mxu_bytes    # slab + two shifted copies
        kwc = (t + 2) * W * 3 * Cin * mxu_bytes     # kw-concat buffer
        acc = 2 * t * W * C_pad * f32               # accumulator + epilogue temp
        wgt = 2 * 9 * Cin * C_pad * mxu_bytes + 2 * C_pad * f32
        return xin + halo + out + slab + kwc + acc + wgt

    th = cands[-1]
    for t in cands:
        if est(t) <= budget_bytes:
            th = t
            break
    # Prefer >= 2 row tiles (pipelining + megacore sharding) when they fit.
    if H // th < 2:
        for t in cands:
            if t < th and est(t) <= budget_bytes and H // t >= 2:
                th = t
                break
    return th


def rdb_conv_forward(x_nchw, weight, bias, *, compute_dtype=jnp.bfloat16):
    """cat([x, relu(conv3x3(x))], dim=1) — matches PyTorch RDB_Conv.forward.

    x_nchw: (N, Cin, H, W) f32
    weight: (Cout, Cin, 3, 3) f32 (PyTorch OIHW layout)
    bias:   (Cout,) f32
    returns (N, Cin + Cout, H, W), dtype of x
    """
    N, Cin, H, W = x_nchw.shape
    Cout = weight.shape[0]
    C_total = Cin + Cout
    C_pad = ((C_total + 127) // 128) * 128            # lane-dense output width

    vmem_limit = _vmem_limit_bytes()
    TH = _pick_tile_h(H, W, Cin, C_pad,
                      budget_bytes=int(vmem_limit * 0.6),
                      in_bytes=x_nchw.dtype.itemsize,
                      mxu_bytes=jnp.dtype(compute_dtype).itemsize)

    # NCHW -> NHWC so channels sit on the lane axis.  No spatial pad pass:
    # the halo / edge zero-padding is synthesized inside the kernel.
    x_nhwc = jnp.transpose(x_nchw, (0, 2, 3, 1))

    # Per-kh im2col weights: (Cout, Cin, 3, 3) -> (kh, kw*Cin+ci, co), placed
    # at output columns [Cin : Cin+Cout]; identity(Cin) at the centre tap,
    # columns [0:Cin], implements the channel-concat passthrough in the matmul.
    w_conv = jnp.transpose(weight, (2, 3, 1, 0)).reshape(3, 3 * Cin, Cout)
    w_k = jnp.zeros((3, 3 * Cin, C_pad), compute_dtype)
    w_k = w_k.at[:, :, Cin:Cin + Cout].set(w_conv.astype(compute_dtype))
    w_k = w_k.at[1, Cin:2 * Cin, :Cin].set(jnp.eye(Cin, dtype=compute_dtype))
    b_k = jnp.zeros((1, C_pad), jnp.float32).at[0, Cin:Cin + Cout].set(
        bias.astype(jnp.float32))

    out_pad = pl.pallas_call(
        _rdb_conv_kernel,
        out_shape=jax.ShapeDtypeStruct((N, H, W, C_pad), x_nchw.dtype),
        grid_spec=pltpu.PrefetchScalarGridSpec(
            num_scalar_prefetch=0,
            grid=(N, H // TH),
            in_specs=[
                # main row-block (non-overlapping)
                pl.BlockSpec((1, TH, W, Cin), lambda b, h: (b, h, 0, 0)),
                # 1-row halos above / below (block size 1 -> block index == row
                # index), clamped at the image edges and zeroed in-kernel there.
                pl.BlockSpec((1, 1, W, Cin),
                             lambda b, h: (b, jnp.maximum(h * TH - 1, 0), 0, 0)),
                pl.BlockSpec((1, 1, W, Cin),
                             lambda b, h: (b, jnp.minimum(h * TH + TH, H - 1), 0, 0)),
                pl.BlockSpec((3, 3 * Cin, C_pad), lambda b, h: (0, 0, 0)),
                pl.BlockSpec((1, C_pad), lambda b, h: (0, 0)),
            ],
            out_specs=pl.BlockSpec((1, TH, W, C_pad), lambda b, h: (b, h, 0, 0)),
        ),
        compiler_params=pltpu.CompilerParams(
            dimension_semantics=("parallel", "parallel"),
            vmem_limit_bytes=vmem_limit),
    )(x_nhwc, x_nhwc, x_nhwc, w_k, b_k)

    # Drop lane padding, back to NCHW.  Channel order: [x (Cin), relu(conv) (Cout)].
    out_nhwc = out_pad[..., :C_total]
    return jnp.transpose(out_nhwc, (0, 3, 1, 2))


def _reference(x_nchw, weight, bias):
    out = lax.conv_general_dilated(
        x_nchw, weight, window_strides=(1, 1), padding="SAME",
        dimension_numbers=("NCHW", "OIHW", "NCHW"),
        precision=lax.Precision.HIGHEST)
    out = jnp.maximum(out + bias[None, :, None, None], 0.0)
    return jnp.concatenate([x_nchw, out], axis=1)


if __name__ == "__main__":
    key = jax.random.PRNGKey(0)
    kx, kw, kb = jax.random.split(key, 3)

    N, Cin, H, W = 2, 4, 16, 16
    Cout = 8

    x = jax.random.normal(kx, (N, Cin, H, W), dtype=jnp.float32)
    fan_in = Cin * 3 * 3
    bound = 1.0 / (fan_in ** 0.5)
    weight = jax.random.uniform(kw, (Cout, Cin, 3, 3), jnp.float32, -bound, bound)
    bias = jax.random.uniform(kb, (Cout,), jnp.float32, -bound, bound)

    out = rdb_conv_forward(x, weight, bias)
    out = jax.block_until_ready(out)

    ref = _reference(x, weight, bias)
    assert out.shape == (N, Cin + Cout, H, W)
    # bf16 MXU operands (f32 accumulation) => ~1e-2-level agreement with the
    # f32 reference; both the conv and the folded passthrough are bf16-rounded.
    max_err = float(jnp.max(jnp.abs(out - ref)))
    assert jnp.allclose(out, ref, atol=5e-2, rtol=5e-2), max_err

    print("KERNEL_OK")
</pallas_src>

<mosaic_0001>
module attributes {stable_mosaic.version = 11 : i64} {
  func.func @_rdb_conv_kernel(%arg0: i32, %arg1: i32, %arg2: memref<1x8x16x4xf32, #tpu.memory_space<vmem>>, %arg3: memref<1x1x16x4xf32, #tpu.memory_space<vmem>>, %arg4: memref<1x1x16x4xf32, #tpu.memory_space<vmem>>, %arg5: memref<3x12x128xbf16, #tpu.memory_space<vmem>>, %arg6: memref<1x128xf32, #tpu.memory_space<vmem>>, %arg7: memref<1x8x16x128xf32, #tpu.memory_space<vmem>>) attributes {dimension_semantics = [#tpu.dimension_semantics<parallel>, #tpu.dimension_semantics<parallel>], iteration_bounds = array<i64: 2, 2>, scalar_prefetch = 0 : i64, scratch_operands = 0 : i64, tpu.core_type = #tpu.core_type<tc>, window_params = [{transform_indices = @transform_0, window_bounds = array<i64: 1, 8, 16, 4>}, {transform_indices = @transform_1, window_bounds = array<i64: 1, 1, 16, 4>}, {transform_indices = @transform_2, window_bounds = array<i64: 1, 1, 16, 4>}, {pipeline_mode = #tpu.pipeline_mode<synchronous>, transform_indices = @transform_3, window_bounds = array<i64: 3, 12, 128>}, {pipeline_mode = #tpu.pipeline_mode<synchronous>, transform_indices = @transform_4, window_bounds = array<i64: 1, 128>}, {transform_indices = @transform_5, window_bounds = array<i64: 1, 8, 16, 128>}]} {
    %c0_i32 = arith.constant 0 : i32
    %0 = arith.cmpi sgt, %arg1, %c0_i32 : i32
    %1 = arith.extui %0 : i1 to i32
    %2 = arith.sitofp %1 : i32 to f32
    %c1_i32 = arith.constant 1 : i32
    %3 = arith.cmpi slt, %arg1, %c1_i32 : i32
    %4 = arith.extui %3 : i1 to i32
    %5 = arith.sitofp %4 : i32 to f32
    %c0 = arith.constant 0 : index
    %c0_0 = arith.constant 0 : index
    %c0_1 = arith.constant 0 : index
    %c0_2 = arith.constant 0 : index
    %6 = vector.load %arg3[%c0, %c0_0, %c0_1, %c0_2] : memref<1x1x16x4xf32, #tpu.memory_space<vmem>>, vector<1x1x16x4xf32>
    %7 = vector.shape_cast %6 : vector<1x1x16x4xf32> to vector<16x4xf32>
    %8 = vector.broadcast %2 : f32 to vector<16x4xf32>
    %9 = arith.mulf %7, %8 : vector<16x4xf32>
    %10 = arith.truncf %9 : vector<16x4xf32> to vector<16x4xbf16>
    %c0_3 = arith.constant 0 : index
    %c0_4 = arith.constant 0 : index
    %c0_5 = arith.constant 0 : index
    %c0_6 = arith.constant 0 : index
    %11 = vector.load %arg4[%c0_3, %c0_4, %c0_5, %c0_6] : memref<1x1x16x4xf32, #tpu.memory_space<vmem>>, vector<1x1x16x4xf32>
    %12 = vector.shape_cast %11 : vector<1x1x16x4xf32> to vector<16x4xf32>
    %13 = vector.broadcast %5 : f32 to vector<16x4xf32>
    %14 = arith.mulf %12, %13 : vector<16x4xf32>
    %15 = arith.truncf %14 : vector<16x4xf32> to vector<16x4xbf16>
    %c0_7 = arith.constant 0 : index
    %c0_8 = arith.constant 0 : index
    %c0_9 = arith.constant 0 : index
    %c0_10 = arith.constant 0 : index
    %16 = vector.load %arg2[%c0_7, %c0_8, %c0_9, %c0_10] : memref<1x8x16x4xf32, #tpu.memory_space<vmem>>, vector<1x8x16x4xf32>
    %17 = vector.shape_cast %16 : vector<1x8x16x4xf32> to vector<8x16x4xf32>
    %18 = arith.truncf %17 : vector<8x16x4xf32> to vector<8x16x4xbf16>
    %19 = vector.shape_cast %10 : vector<16x4xbf16> to vector<1x16x4xbf16>
    %20 = vector.shape_cast %15 : vector<16x4xbf16> to vector<1x16x4xbf16>
    %21 = tpu.concatenate %19, %18, %20 in 0 : vector<1x16x4xbf16>, vector<8x16x4xbf16>, vector<1x16x4xbf16> -> vector<10x16x4xbf16>
    %cst = arith.constant 0.000000e+00 : bf16
    %22 = vector.broadcast %cst : bf16 to vector<10x1x4xbf16>
    %23 = vector.extract_strided_slice %21 {offsets = [0, 0, 0], sizes = [10, 15, 4], strides = [1, 1, 1]} : vector<10x16x4xbf16> to vector<10x15x4xbf16>
    %24 = tpu.concatenate %22, %23 in 1 : vector<10x1x4xbf16>, vector<10x15x4xbf16> -> vector<10x16x4xbf16>
    %25 = vector.extract_strided_slice %21 {offsets = [0, 1, 0], sizes = [10, 15, 4], strides = [1, 1, 1]} : vector<10x16x4xbf16> to vector<10x15x4xbf16>
    %26 = tpu.concatenate %25, %22 in 1 : vector<10x15x4xbf16>, vector<10x1x4xbf16> -> vector<10x16x4xbf16>
    %27 = tpu.concatenate %24, %21, %26 in 2 : vector<10x16x4xbf16>, vector<10x16x4xbf16>, vector<10x16x4xbf16> -> vector<10x16x12xbf16>
    %cst_11 = arith.constant 0.000000e+00 : f32
    %28 = vector.broadcast %cst_11 : f32 to vector<128x128xf32>
    %29 = vector.extract_strided_slice %27 {offsets = [0, 0, 0], sizes = [8, 16, 12], strides = [1, 1, 1]} : vector<10x16x12xbf16> to vector<8x16x12xbf16>
    %30 = vector.shape_cast %29 : vector<8x16x12xbf16> to vector<128x12xbf16>
    %c0_12 = arith.constant 0 : index
    %c0_13 = arith.constant 0 : index
    %c0_14 = arith.constant 0 : index
    %31 = vector.load %arg5[%c0_12, %c0_13, %c0_14] : memref<3x12x128xbf16, #tpu.memory_space<vmem>>, vector<1x12x128xbf16>
    %32 = vector.shape_cast %31 : vector<1x12x128xbf16> to vector<12x128xbf16>
    %cst_15 = arith.constant dense<0.000000e+00> : vector<128x128xf32>
    %33 = tpu.matmul %30, %32, %cst_15 {dimension_numbers = #tpu.dot_dimension_numbers<[1], [0], [0], [1], [0, 0, 1, 1], [], []>} : vector<128x12xbf16>, vector<12x128xbf16>, vector<128x128xf32> -> vector<128x128xf32>
    %34 = arith.addf %28, %33 : vector<128x128xf32>
    %35 = vector.extract_strided_slice %27 {offsets = [1, 0, 0], sizes = [8, 16, 12], strides = [1, 1, 1]} : vector<10x16x12xbf16> to vector<8x16x12xbf16>
    %36 = vector.shape_cast %35 : vector<8x16x12xbf16> to vector<128x12xbf16>
    %c1 = arith.constant 1 : index
    %c0_16 = arith.constant 0 : index
    %c0_17 = arith.constant 0 : index
    %37 = vector.load %arg5[%c1, %c0_16, %c0_17] : memref<3x12x128xbf16, #tpu.memory_space<vmem>>, vector<1x12x128xbf16>
    %38 = vector.shape_cast %37 : vector<1x12x128xbf16> to vector<12x128xbf16>
    %cst_18 = arith.constant dense<0.000000e+00> : vector<128x128xf32>
    %39 = tpu.matmul %36, %38, %cst_18 {dimension_numbers = #tpu.dot_dimension_numbers<[1], [0], [0], [1], [0, 0, 1, 1], [], []>} : vector<128x12xbf16>, vector<12x128xbf16>, vector<128x128xf32> -> vector<128x128xf32>
    %40 = arith.addf %34, %39 : vector<128x128xf32>
    %41 = vector.extract_strided_slice %27 {offsets = [2, 0, 0], sizes = [8, 16, 12], strides = [1, 1, 1]} : vector<10x16x12xbf16> to vector<8x16x12xbf16>
    %42 = vector.shape_cast %41 : vector<8x16x12xbf16> to vector<128x12xbf16>
    %c2 = arith.constant 2 : index
    %c0_19 = arith.constant 0 : index
    %c0_20 = arith.constant 0 : index
    %43 = vector.load %arg5[%c2, %c0_19, %c0_20] : memref<3x12x128xbf16, #tpu.memory_space<vmem>>, vector<1x12x128xbf16>
    %44 = vector.shape_cast %43 : vector<1x12x128xbf16> to vector<12x128xbf16>
    %cst_21 = arith.constant dense<0.000000e+00> : vector<128x128xf32>
    %45 = tpu.matmul %42, %44, %cst_21 {dimension_numbers = #tpu.dot_dimension_numbers<[1], [0], [0], [1], [0, 0, 1, 1], [], []>} : vector<128x12xbf16>, vector<12x128xbf16>, vector<128x128xf32> -> vector<128x128xf32>
    %46 = arith.addf %40, %45 : vector<128x128xf32>
    %c0_22 = arith.constant 0 : index
    %c0_23 = arith.constant 0 : index
    %47 = vector.load %arg6[%c0_22, %c0_23] : memref<1x128xf32, #tpu.memory_space<vmem>>, vector<1x128xf32>
    %48 = vector.broadcast %47 : vector<1x128xf32> to vector<128x128xf32>
    %49 = arith.addf %46, %48 : vector<128x128xf32>
    %50 = tpu.iota {dimensions = array<i32: 1>} : vector<128x128xi32>
    %c4_i32 = arith.constant 4 : i32
    %51 = vector.broadcast %c4_i32 : i32 to vector<128x128xi32>
    %52 = arith.cmpi sge, %50, %51 : vector<128x128xi32>
    %cst_24 = arith.constant 0.000000e+00 : f32
    %53 = vector.broadcast %cst_24 : f32 to vector<128x128xf32>
    %54 = arith.maximumf %49, %53 : vector<128x128xf32>
    %55 = arith.select %52, %54, %49 : vector<128x128xi1>, vector<128x128xf32>
    %56 = vector.shape_cast %55 : vector<128x128xf32> to vector<1x8x16x128xf32>
    %c0_25 = arith.constant 0 : index
    %c0_26 = arith.constant 0 : index
    %c0_27 = arith.constant 0 : index
    %c0_28 = arith.constant 0 : index
    %57 = vector.load %arg7[%c0_25, %c0_26, %c0_27, %c0_28] : memref<1x8x16x128xf32, #tpu.memory_space<vmem>>, vector<1x8x16x128xf32>
    tpu.vector_store %arg7[%c0_25, %c0_26, %c0_27, %c0_28], %56 {strides = array<i32>} : memref<1x8x16x128xf32, #tpu.memory_space<vmem>>, vector<1x8x16x128xf32>,
    return
  }
  func.func @transform_0(%arg0: i32, %arg1: i32) -> (i32, i32, i32, i32) {
    %c0_i32 = arith.constant 0 : i32
    %c0_i32_0 = arith.constant 0 : i32
    %c0_i32_1 = arith.constant 0 : i32
    return %arg0, %arg1, %c0_i32, %c0_i32_0 : i32, i32, i32, i32
  }
  func.func @transform_1(%arg0: i32, %arg1: i32) -> (i32, i32, i32, i32) {
    %c8_i32 = arith.constant 8 : i32
    %0 = arith.muli %arg1, %c8_i32 : i32
    %c1_i32 = arith.constant 1 : i32
    %1 = arith.subi %0, %c1_i32 : i32
    %c0_i32 = arith.constant 0 : i32
    %2 = arith.maxsi %1, %c0_i32 : i32
    %c0_i32_0 = arith.constant 0 : i32
    %c0_i32_1 = arith.constant 0 : i32
    %c0_i32_2 = arith.constant 0 : i32
    return %arg0, %2, %c0_i32_0, %c0_i32_1 : i32, i32, i32, i32
  }
  func.func @transform_2(%arg0: i32, %arg1: i32) -> (i32, i32, i32, i32) {
    %c8_i32 = arith.constant 8 : i32
    %0 = arith.muli %arg1, %c8_i32 : i32
    %c8_i32_0 = arith.constant 8 : i32
    %1 = arith.addi %0, %c8_i32_0 : i32
    %c15_i32 = arith.constant 15 : i32
    %2 = arith.minsi %1, %c15_i32 : i32
    %c0_i32 = arith.constant 0 : i32
    %c0_i32_1 = arith.constant 0 : i32
    %c0_i32_2 = arith.constant 0 : i32
    return %arg0, %2, %c0_i32, %c0_i32_1 : i32, i32, i32, i32
  }
  func.func @transform_3(%arg0: i32, %arg1: i32) -> (i32, i32, i32) {
    %c0_i32 = arith.constant 0 : i32
    %c0_i32_0 = arith.constant 0 : i32
    %c0_i32_1 = arith.constant 0 : i32
    %c0_i32_2 = arith.constant 0 : i32
    return %c0_i32, %c0_i32_0, %c0_i32_1 : i32, i32, i32
  }
  func.func @transform_4(%arg0: i32, %arg1: i32) -> (i32, i32) {
    %c0_i32 = arith.constant 0 : i32
    %c0_i32_0 = arith.constant 0 : i32
    %c0_i32_1 = arith.constant 0 : i32
    return %c0_i32, %c0_i32_0 : i32, i32
  }
  func.func @transform_5(%arg0: i32, %arg1: i32) -> (i32, i32, i32, i32) {
    %c0_i32 = arith.constant 0 : i32
    %c0_i32_0 = arith.constant 0 : i32
    %c0_i32_1 = arith.constant 0 : i32
    return %arg0, %arg1, %c0_i32, %c0_i32_0 : i32, i32, i32, i32
  }
}

</mosaic_0001>

<llo_original>
// kernel: tpu_custom_call.1
$region0: #{tpu_custom_call.1}
  #allocation0 [shape = 'u32[]', space=smem, size = 0x4, offset = 0x4, fixed_abs, tag = 'smem constant byte address 0x4 - core index']
  #allocation1 [shape = 'u32[144,128]{1,0:T(1,128)}', space=vmem, size = 0x12000, scoped, tag = 'internal scratch']
  %s0 = inlined_call_operand.vmem [shape: f32[2,16,16,4], index: 0, kind: input, shape index: {}]
  %s1 = inlined_call_operand.vmem [shape: f32[2,16,16,4], index: 1, kind: input, shape index: {}]
  %s2 = inlined_call_operand.vmem [shape: f32[2,16,16,4], index: 2, kind: input, shape index: {}]
  %s3 = inlined_call_operand.vmem [shape: bf16[3,12,128], index: 3, kind: input, shape index: {}]
  %s4 = inlined_call_operand.vmem [shape: f32[1,128], index: 4, kind: input, shape index: {}]
  %s5 = inlined_call_operand.hbm [shape: f32[2,16,16,128], index: 5, kind: output, shape index: {}]
  %s6 = sld [smem:[#allocation0]]
  $region53: #{tpu_custom_call.1} parent=0
    _
  %s8 = ssub.s32 1, %s6
  %s9 = scalar_select 0, %s8, %s6
  $region1: #{tpu_custom_call.1} parent=0
    #allocation2 [shape = 'u8[131072]{0}', space=vmem, size = 0x20000, scoped, tag = 'output window, operand 0']
    #allocation3 [shape = 's32[2]{0}', space=sflag, size = 0x8, scoped, tag = 'scoped memory for tpu_custom_call.1']
    %10 = vsyncpa [#allocation3], 0
    %s11 = scalar_lea.sflag [#allocation3], 1
    %12 = vsyncpa %s11, 0
    loop: start=0, step=1, limit=6
    $region2: #{tpu_custom_call.1} parent=1 // loop_pre_header
      _
    $region3: #{tpu_custom_call.1} parent=1 // loop_header
      %s14 = sphi 0, %s18
      %p15 = scmp.ge.s32.totalorder %s14, 6
      %s21 = sphi 0, %s33
      %s22 = sphi 0, %s29
      %s23 = sphi 0, %s21
      %s24 = sphi 0, %s22
      %s25 = sphi 0, %s23
      %s26 = sphi 0, %s24
      %s38 = sphi 0, %s40
      %s41 = sphi 0, %s38
      %s42 = sphi 0, %s41
      %s58 = sphi 0, %s42
      %s74 = sphi 0, %s76
      %s77 = sphi 0, %s74
      %s78 = sphi 0, %s77
      %s94 = sphi 0, %s78
      %s110 = sphi 0, %s112
      %s113 = sphi 0, %s110
      %s114 = sphi 0, %s113
      %s130 = sphi 0, %s114
      %s134 = sphi 0, %s134
      %s136 = sphi 0, %s134
      %s137 = sphi 0, %s136
      %s151 = sphi 0, %s137
      %s155 = sphi 0, %s155
      %s157 = sphi 0, %s155
      %s158 = sphi 0, %s157
      %s172 = sphi 0, %s158
      %s180 = sphi 0, %s182
      %s183 = sphi 0, %s180
      %s184 = sphi 0, %s183
      %s200 = sphi 0, %s184
    $region4: #{tpu_custom_call.1} parent=1 // loop_header_branch
      %17 = sbr.rel (%p15) target = $region8
    $region5: #{tpu_custom_call.1} parent=1 // loop_body
      %s19 = ssub.s32 %s14, 1
      %s20 = ssub.s32 %s14, 2
      %s27 = sadd.s32 1, %s22
      %p28 = scmp.ge.s32.totalorder %s27, 2
      %s29 = scalar_select %p28, 0, %s27
      %s30 = sadd.s32 1, %s21
      %s31 = scalar_select %p28, %s30, %s21
      %p32 = scmp.ge.s32.totalorder %s31, 2
      %s33 = scalar_select %p32, 0, %s31
      %s34 = ssub.s32 %s21, %s33
      %s35 = ssub.s32 %s22, %s29
      %s36 = sor.u32 %s34, %s35
      %p37 = scmp.eq.s32.totalorder %s36, 0
      %s39 = sadd.s32 %s38, 1
      %s40 = scalar_select %p37, %s38, %s39
      %p43 = pneg %p37
      %p44 = scmp.eq.s32.totalorder %s14, 3
      %p45 = por %p43, %p44
      %p46 = scmp.ne.s32.totalorder %s38, %s41
      %p47 = scmp.eq.s32.totalorder %s14, 0
      %p48 = por %p46, %p47
      %p49 = scmp.ne.s32.totalorder %s38, %s41
      %p50 = scmp.eq.s32.totalorder %s19, 3
      %p51 = por %p49, %p50
      %p52 = scmp.ne.s32.totalorder %s41, %s42
      %p53 = scmp.eq.s32.totalorder %s19, 0
      %p54 = por %p52, %p53
      %p55 = scmp.ne.s32.totalorder %s41, %s42
      %p56 = scmp.eq.s32.totalorder %s20, 3
      %p57 = por %p55, %p56
      %p59 = scmp.ne.s32.totalorder %s42, %s58
      %p60 = scmp.eq.s32.totalorder %s20, 0
      %p61 = por %p59, %p60
      %s62 = smul.u32 %s22, 8
      %s63 = ssub.s32 %s62, 1
      %p64 = scmp.gt.s32.totalorder %s63, 0
      %s65 = scalar_select %p64, %s63, 0
      %s66 = smul.u32 %s29, 8
      %s67 = ssub.s32 %s66, 1
      %p68 = scmp.gt.s32.totalorder %s67, 0
      %s69 = scalar_select %p68, %s67, 0
      %s70 = ssub.s32 %s21, %s33
      %s71 = ssub.s32 %s65, %s69
      %s72 = sor.u32 %s70, %s71
      %p73 = scmp.eq.s32.totalorder %s72, 0
      %s75 = sadd.s32 %s74, 1
      %s76 = scalar_select %p73, %s74, %s75
      %p79 = pneg %p73
      %p80 = scmp.eq.s32.totalorder %s14, 3
      %p81 = por %p79, %p80
      %p82 = scmp.ne.s32.totalorder %s74, %s77
      %p83 = scmp.eq.s32.totalorder %s14, 0
      %p84 = por %p82, %p83
      %p85 = scmp.ne.s32.totalorder %s74, %s77
      %p86 = scmp.eq.s32.totalorder %s19, 3
      %p87 = por %p85, %p86
      %p88 = scmp.ne.s32.totalorder %s77, %s78
      %p89 = scmp.eq.s32.totalorder %s19, 0
      %p90 = por %p88, %p89
      %p91 = scmp.ne.s32.totalorder %s77, %s78
      %p92 = scmp.eq.s32.totalorder %s20, 3
      %p93 = por %p91, %p92
      %p95 = scmp.ne.s32.totalorder %s78, %s94
      %p96 = scmp.eq.s32.totalorder %s20, 0
      %p97 = por %p95, %p96
      %s98 = smul.u32 %s22, 8
      %s99 = sadd.s32 %s98, 8
      %p100 = scmp.lt.s32.totalorder %s99, 15
      %s101 = scalar_select %p100, %s99, 15
      %s102 = smul.u32 %s29, 8
      %s103 = sadd.s32 %s102, 8
      %p104 = scmp.lt.s32.totalorder %s103, 15
      %s105 = scalar_select %p104, %s103, 15
      %s106 = ssub.s32 %s21, %s33
      %s107 = ssub.s32 %s101, %s105
      %s108 = sor.u32 %s106, %s107
      %p109 = scmp.eq.s32.totalorder %s108, 0
      %s111 = sadd.s32 %s110, 1
      %s112 = scalar_select %p109, %s110, %s111
      %p115 = pneg %p109
      %p116 = scmp.eq.s32.totalorder %s14, 3
      %p117 = por %p115, %p116
      %p118 = scmp.ne.s32.totalorder %s110, %s113
      %p119 = scmp.eq.s32.totalorder %s14, 0
      %p120 = por %p118, %p119
      %p121 = scmp.ne.s32.totalorder %s110, %s113
      %p122 = scmp.eq.s32.totalorder %s19, 3
      %p123 = por %p121, %p122
      %p124 = scmp.ne.s32.totalorder %s113, %s114
      %p125 = scmp.eq.s32.totalorder %s19, 0
      %p126 = por %p124, %p125
      %p127 = scmp.ne.s32.totalorder %s113, %s114
      %p128 = scmp.eq.s32.totalorder %s20, 3
      %p129 = por %p127, %p128
      %p131 = scmp.ne.s32.totalorder %s114, %s130
      %p132 = scmp.eq.s32.totalorder %s20, 0
      %p133 = por %p131, %p132
      %s135 = sadd.s32 %s134, 1
      %p138 = scmp.eq.s32.totalorder %s14, 3
      %p139 = scmp.ne.s32.totalorder %s134, %s136
      %p140 = scmp.eq.s32.totalorder %s14, 0
      %p141 = por %p139, %p140
      %p142 = scmp.ne.s32.totalorder %s134, %s136
      %p143 = scmp.eq.s32.totalorder %s19, 3
      %p144 = por %p142, %p143
      %p145 = scmp.ne.s32.totalorder %s136, %s137
      %p146 = scmp.eq.s32.totalorder %s19, 0
      %p147 = por %p145, %p146
      %p148 = scmp.ne.s32.totalorder %s136, %s137
      %p149 = scmp.eq.s32.totalorder %s20, 3
      %p150 = por %p148, %p149
      %p152 = scmp.ne.s32.totalorder %s137, %s151
      %p153 = scmp.eq.s32.totalorder %s20, 0
      %p154 = por %p152, %p153
      %s156 = sadd.s32 %s155, 1
      %p159 = scmp.eq.s32.totalorder %s14, 3
      %p160 = scmp.ne.s32.totalorder %s155, %s157
      %p161 = scmp.eq.s32.totalorder %s14, 0
      %p162 = por %p160, %p161
      %p163 = scmp.ne.s32.totalorder %s155, %s157
      %p164 = scmp.eq.s32.totalorder %s19, 3
      %p165 = por %p163, %p164
      %p166 = scmp.ne.s32.totalorder %s157, %s158
      %p167 = scmp.eq.s32.totalorder %s19, 0
      %p168 = por %p166, %p167
      %p169 = scmp.ne.s32.totalorder %s157, %s158
      %p170 = scmp.eq.s32.totalorder %s20, 3
      %p171 = por %p169, %p170
      %p173 = scmp.ne.s32.totalorder %s158, %s172
      %p174 = scmp.eq.s32.totalorder %s20, 0
      %p175 = por %p173, %p174
      %s176 = ssub.s32 %s21, %s33
      %s177 = ssub.s32 %s22, %s29
      %s178 = sor.u32 %s176, %s177
      %p179 = scmp.eq.s32.totalorder %s178, 0
      %s181 = sadd.s32 %s180, 1
      %s182 = scalar_select %p179, %s180, %s181
      %p185 = pneg %p179
      %p186 = scmp.eq.s32.totalorder %s14, 3
      %p187 = por %p185, %p186
      %p188 = scmp.ne.s32.totalorder %s180, %s183
      %p189 = scmp.eq.s32.totalorder %s14, 0
      %p190 = por %p188, %p189
      %p191 = scmp.ne.s32.totalorder %s180, %s183
      %p192 = scmp.eq.s32.totalorder %s19, 3
      %p193 = por %p191, %p192
      %p194 = scmp.ne.s32.totalorder %s183, %s184
      %p195 = scmp.eq.s32.totalorder %s19, 0
      %p196 = por %p194, %p195
      %p197 = scmp.ne.s32.totalorder %s183, %s184
      %p198 = scmp.eq.s32.totalorder %s20, 3
      %p199 = por %p197, %p198
      %p201 = scmp.ne.s32.totalorder %s184, %s200
      %p202 = scmp.eq.s32.totalorder %s20, 0
      %p203 = por %p201, %p202
      %p204 = scmp.le.s32.totalorder 1, %s14
      %p205 = scmp.lt.s32.totalorder %s14, 5
      %p206 = pnand %p204, %p205
      %p207 = pneg %p206
      // Predicated region
      $region9: #{tpu_custom_call.1} parent=5 // pred_check
        _
      $region10: #{tpu_custom_call.1} parent=5 // pred_check_branch
        %209 = sbr.rel (%p206) target = $region12
      $region11: #{tpu_custom_call.1} parent=5 // pred_region
        %s210 = ssub.s32 %s14, 1
        // Predicated region
        $region13: #{tpu_custom_call.1} parent=11 // pred_check
          %p211 = pneg %p147
        $region14: #{tpu_custom_call.1} parent=11 // pred_check_branch
          %213 = sbr.rel (%p211) target = $region16
        $region15: #{tpu_custom_call.1} parent=11 // pred_region
          _
        $region16: #{tpu_custom_call.1} parent=11 // pred_fallthru
          _
        // Predicated region
        $region17: #{tpu_custom_call.1} parent=11 // pred_check
          %p214 = pneg %p168
        $region18: #{tpu_custom_call.1} parent=11 // pred_check_branch
          %216 = sbr.rel (%p214) target = $region20
        $region19: #{tpu_custom_call.1} parent=11 // pred_region
          _
        $region20: #{tpu_custom_call.1} parent=11 // pred_fallthru
          _
      $region12: #{tpu_custom_call.1} parent=5 // pred_fallthru
        _
      %p217 = scmp.lt.s32.totalorder %s14, 4
      // Predicated region
      $region21: #{tpu_custom_call.1} parent=5 // pred_check
        %p218 = pneg %p217
      $region22: #{tpu_custom_call.1} parent=5 // pred_check_branch
        %220 = sbr.rel (%p218) target = $region24
      $region23: #{tpu_custom_call.1} parent=5 // pred_region
        // Predicated region
        $region25: #{tpu_custom_call.1} parent=23 // pred_check
          %p221 = pneg %p48
        $region26: #{tpu_custom_call.1} parent=23 // pred_check_branch
          %223 = sbr.rel (%p221) target = $region28
        $region27: #{tpu_custom_call.1} parent=23 // pred_region
          %s224 = smul.u32 8, %s22
          %p225 = scmp.lt.s32.totalorder %s21, 1
          %s226 = scalar_select %p225, %s21, 1
          %p227 = scmp.lt.s32.totalorder %s224, 15
          %s228 = scalar_select %p227, %s224, 15
          %s229 = smul.addr %s228, 2
          %s230 = smul.addr %s226, 32
          %s231 = sadd.s32 %s229, %s230
          %s232 = smul.addr %s231, 8
          %s233 = scalar_lea.vmem %s0, %s232
          %s234 = smul.u32 8, %s22
        $region28: #{tpu_custom_call.1} parent=23 // pred_fallthru
          _
        // Predicated region
        $region29: #{tpu_custom_call.1} parent=23 // pred_check
          %p235 = pneg %p84
        $region30: #{tpu_custom_call.1} parent=23 // pred_check_branch
          %237 = sbr.rel (%p235) target = $region32
        $region31: #{tpu_custom_call.1} parent=23 // pred_region
          %s238 = smul.u32 %s22, 8
          %s239 = ssub.s32 %s238, 1
          %p240 = scmp.gt.s32.totalorder %s239, 0
          %s241 = scalar_select %p240, %s239, 0
          %p242 = scmp.lt.s32.totalorder %s21, 1
          %s243 = scalar_select %p242, %s21, 1
          %p244 = scmp.lt.s32.totalorder %s241, 15
          %s245 = scalar_select %p244, %s241, 15
          %s246 = smul.addr %s245, 2
          %s247 = smul.addr %s243, 32
          %s248 = sadd.s32 %s246, %s247
          %s249 = smul.addr %s248, 8
          %s250 = scalar_lea.vmem %s1, %s249
          %s251 = smul.u32 %s22, 8
          %s252 = ssub.s32 %s251, 1
          %p253 = scmp.gt.s32.totalorder %s252, 0
          %s254 = scalar_select %p253, %s252, 0
        $region32: #{tpu_custom_call.1} parent=23 // pred_fallthru
          _
        // Predicated region
        $region33: #{tpu_custom_call.1} parent=23 // pred_check
          %p255 = pneg %p120
        $region34: #{tpu_custom_call.1} parent=23 // pred_check_branch
          %257 = sbr.rel (%p255) target = $region36
        $region35: #{tpu_custom_call.1} parent=23 // pred_region
          %s258 = smul.u32 %s22, 8
          %s259 = sadd.s32 %s258, 8
          %p260 = scmp.lt.s32.totalorder %s259, 15
          %s261 = scalar_select %p260, %s259, 15
          %p262 = scmp.lt.s32.totalorder %s21, 1
          %s263 = scalar_select %p262, %s21, 1
          %p264 = scmp.lt.s32.totalorder %s261, 15
          %s265 = scalar_select %p264, %s261, 15
          %s266 = smul.addr %s265, 2
          %s267 = smul.addr %s263, 32
          %s268 = sadd.s32 %s266, %s267
          %s269 = smul.addr %s268, 8
          %s270 = scalar_lea.vmem %s2, %s269
          %s271 = smul.u32 %s22, 8
          %s272 = sadd.s32 %s271, 8
          %p273 = scmp.lt.s32.totalorder %s272, 15
          %s274 = scalar_select %p273, %s272, 15
        $region36: #{tpu_custom_call.1} parent=23 // pred_fallthru
          _
      $region24: #{tpu_custom_call.1} parent=5 // pred_fallthru
        _
      %p275 = scmp.le.s32.totalorder 1, %s14
      %p276 = scmp.lt.s32.totalorder %s14, 5
      %p277 = pnand %p275, %p276
      %p278 = pneg %p277
      // Predicated region
      $region37: #{tpu_custom_call.1} parent=5 // pred_check
        _
      $region38: #{tpu_custom_call.1} parent=5 // pred_check_branch
        %280 = sbr.rel (%p277) target = $region40
      $region39: #{tpu_custom_call.1} parent=5 // pred_region
        %s281 = ssub.s32 %s14, 1
        %s282 = smul.u32 8, %s24
        %p283 = scmp.lt.s32.totalorder %s23, 1
        %s284 = scalar_select %p283, %s23, 1
        %p285 = scmp.lt.s32.totalorder %s282, 15
        %s286 = scalar_select %p285, %s282, 15
        %s287 = smul.addr %s286, 2
        %s288 = smul.addr %s284, 32
        %s289 = sadd.s32 %s287, %s288
        %s290 = smul.addr %s289, 8
        %s291 = scalar_lea.vmem %s0, %s290
        %p292 = pneg %p54
        %p293 = pneg %p51
        %s294 = smul.u32 %s24, 8
        %s295 = ssub.s32 %s294, 1
        %p296 = scmp.gt.s32.totalorder %s295, 0
        %s297 = scalar_select %p296, %s295, 0
        %p298 = scmp.lt.s32.totalorder %s23, 1
        %s299 = scalar_select %p298, %s23, 1
        %p300 = scmp.lt.s32.totalorder %s297, 15
        %s301 = scalar_select %p300, %s297, 15
        %s302 = smul.addr %s301, 2
        %s303 = smul.addr %s299, 32
        %s304 = sadd.s32 %s302, %s303
        %s305 = smul.addr %s304, 8
        %s306 = scalar_lea.vmem %s1, %s305
        %p307 = pneg %p90
        %p308 = pneg %p87
        %s309 = smul.u32 %s24, 8
        %s310 = sadd.s32 %s309, 8
        %p311 = scmp.lt.s32.totalorder %s310, 15
        %s312 = scalar_select %p311, %s310, 15
        %p313 = scmp.lt.s32.totalorder %s23, 1
        %s314 = scalar_select %p313, %s23, 1
        %p315 = scmp.lt.s32.totalorder %s312, 15
        %s316 = scalar_select %p315, %s312, 15
        %s317 = smul.addr %s316, 2
        %s318 = smul.addr %s314, 32
        %s319 = sadd.s32 %s317, %s318
        %s320 = smul.addr %s319, 8
        %s321 = scalar_lea.vmem %s2, %s320
        %p322 = pneg %p126
        %p323 = pneg %p123
        %p324 = pneg %p147
        %p325 = pneg %p144
        %p326 = pneg %p168
        %p327 = pneg %p165
        %p328 = pneg %p196
        %p329 = pneg %p193
        %s330 = sand.u32 %s183, 1
        %s331 = scalar_lea.sflag [#allocation3], %s330
        %s332 = sand.u32 %s183, 1
        %s333 = smul.addr %s332, 128
        %s334 = scalar_lea.vmem [#allocation2], %s333
        %s335 = smul.u32 8, %s24
        %p336 = scmp.lt.s32.totalorder %s23, 1
        %s337 = scalar_select %p336, %s23, 1
        %p338 = scmp.lt.s32.totalorder %s335, 15
        %s339 = scalar_select %p338, %s335, 15
        %s340 = smul.addr %s339, 2
        %s341 = smul.addr %s337, 32
        %s342 = sadd.s32 %s340, %s341
        %s343 = smul.addr %s342, 8
        %s344 = scalar_lea.vmem %s0, %s343
        %s345 = smul.u32 8, %s24
        %s346 = smul.u32 %s24, 8
        %s347 = ssub.s32 %s346, 1
        %p348 = scmp.gt.s32.totalorder %s347, 0
        %s349 = scalar_select %p348, %s347, 0
        %p350 = scmp.lt.s32.totalorder %s23, 1
        %s351 = scalar_select %p350, %s23, 1
        %p352 = scmp.lt.s32.totalorder %s349, 15
        %s353 = scalar_select %p352, %s349, 15
        %s354 = smul.addr %s353, 2
        %s355 = smul.addr %s351, 32
        %s356 = sadd.s32 %s354, %s355
        %s357 = smul.addr %s356, 8
        %s358 = scalar_lea.vmem %s1, %s357
        %s359 = smul.u32 %s24, 8
        %s360 = ssub.s32 %s359, 1
        %p361 = scmp.gt.s32.totalorder %s360, 0
        %s362 = scalar_select %p361, %s360, 0
        %s363 = smul.u32 %s24, 8
        %s364 = sadd.s32 %s363, 8
        %p365 = scmp.lt.s32.totalorder %s364, 15
        %s366 = scalar_select %p365, %s364, 15
        %p367 = scmp.lt.s32.totalorder %s23, 1
        %s368 = scalar_select %p367, %s23, 1
        %p369 = scmp.lt.s32.totalorder %s366, 15
        %s370 = scalar_select %p369, %s366, 15
        %s371 = smul.addr %s370, 2
        %s372 = smul.addr %s368, 32
        %s373 = sadd.s32 %s371, %s372
        %s374 = smul.addr %s373, 8
        %s375 = scalar_lea.vmem %s2, %s374
        %s376 = smul.u32 %s24, 8
        %s377 = sadd.s32 %s376, 8
        %p378 = scmp.lt.s32.totalorder %s377, 15
        %s379 = scalar_select %p378, %s377, 15
        %s380 = smul.u32 8, %s24
        %p382 = scmp.gt.s32.totalorder %s24, 0
        %s383 = scalar_select %p382, 1, 0
        %s384 = scvt.s32.f32 %s383
        %p385 = scmp.lt.s32.totalorder %s24, 1
        %s386 = scalar_select %p385, 1, 0
        %s387 = scvt.s32.f32 %s386
        %v388 = vld [vmem:[%s358] sm:$0xff]
        %v389 = vld [vmem:[%s358 + $0x8] sm:$0xff]
        %v390 = vstv %s384
        %v391 = vmul.f32 %v388, %v390
        %v392 = vmul.f32 %v389, %v390
        %v393 = vpack.c.bf16 %v392, %v391
        %v394 = vld [vmem:[%s375] sm:$0xff]
        %v395 = vld [vmem:[%s375 + $0x8] sm:$0xff]
        %v396 = vstv %s387
        %v397 = vmul.f32 %v394, %v396
        %v398 = vmul.f32 %v395, %v396
        %v399 = vpack.c.bf16 %v398, %v397
        %v400 = vld [vmem:[%s344] sm:$0xff]
        %v401 = vld [vmem:[%s344 + $0x8] sm:$0xff]
        %v402 = vld [vmem:[%s344 + $0x10] sm:$0xff]
        %v403 = vld [vmem:[%s344 + $0x18] sm:$0xff]
        %v404 = vld [vmem:[%s344 + $0x20] sm:$0xff]
        %v405 = vld [vmem:[%s344 + $0x28] sm:$0xff]
        %v406 = vld [vmem:[%s344 + $0x30] sm:$0xff]
        %v407 = vld [vmem:[%s344 + $0x38] sm:$0xff]
        %v408 = vld [vmem:[%s344 + $0x40] sm:$0xff]
        %v409 = vld [vmem:[%s344 + $0x48] sm:$0xff]
        %v410 = vld [vmem:[%s344 + $0x50] sm:$0xff]
        %v411 = vld [vmem:[%s344 + $0x58] sm:$0xff]
        %v412 = vld [vmem:[%s344 + $0x60] sm:$0xff]
        %v413 = vld [vmem:[%s344 + $0x68] sm:$0xff]
        %v414 = vld [vmem:[%s344 + $0x70] sm:$0xff]
        %v415 = vld [vmem:[%s344 + $0x78] sm:$0xff]
        %v416 = vpack.c.bf16 %v401, %v400
        %v417 = vpack.c.bf16 %v403, %v402
        %v418 = vpack.c.bf16 %v405, %v404
        %v419 = vpack.c.bf16 %v407, %v406
        %v420 = vpack.c.bf16 %v409, %v408
        %v421 = vpack.c.bf16 %v411, %v410
        %v422 = vpack.c.bf16 %v413, %v412
        %v423 = vpack.c.bf16 %v415, %v414
        %v425 = vshrl.u32 %v393, 16
        %v427 = vrot.slane %v425, 7
        %v428 = vshll.u32 %v393, 16
        %v430 = vor.u32 %v427, %v428
        %v432 = vshrl.u32 %v416, 16
        %v434 = vrot.slane %v432, 7
        %v435 = vshll.u32 %v416, 16
        %v437 = vor.u32 %v434, %v435
        %v439 = vshrl.u32 %v417, 16
        %v441 = vrot.slane %v439, 7
        %v442 = vshll.u32 %v417, 16
        %v444 = vor.u32 %v441, %v442
        %v446 = vshrl.u32 %v418, 16
        %v448 = vrot.slane %v446, 7
        %v449 = vshll.u32 %v418, 16
        %v451 = vor.u32 %v448, %v449
        %v453 = vshrl.u32 %v419, 16
        %v455 = vrot.slane %v453, 7
        %v456 = vshll.u32 %v419, 16
        %v458 = vor.u32 %v455, %v456
        %v460 = vshrl.u32 %v420, 16
        %v462 = vrot.slane %v460, 7
        %v463 = vshll.u32 %v420, 16
        %v465 = vor.u32 %v462, %v463
        %v467 = vshrl.u32 %v421, 16
        %v469 = vrot.slane %v467, 7
        %v470 = vshll.u32 %v421, 16
        %v472 = vor.u32 %v469, %v470
        %v474 = vshrl.u32 %v422, 16
        %v476 = vrot.slane %v474, 7
        %v477 = vshll.u32 %v422, 16
        %v479 = vor.u32 %v476, %v477
        %v481 = vshrl.u32 %v423, 16
        %v483 = vrot.slane %v481, 7
        %v484 = vshll.u32 %v423, 16
        %v486 = vor.u32 %v483, %v484
        %v488 = vshrl.u32 %v399, 16
        %v490 = vrot.slane %v488, 7
        %v491 = vshll.u32 %v399, 16
        %v493 = vor.u32 %v490, %v491
        %vm504 = vcmask 1040384
        %vm505 = vsmask.f32 256
        %vm506 = vmand %vm504, %vm505
        %v507 = vsel %vm506, 0, %v430
        %v508 = vsel %vm506, 0, %v437
        %v509 = vsel %vm506, 0, %v444
        %v510 = vsel %vm506, 0, %v451
        %v511 = vsel %vm506, 0, %v458
        %v512 = vsel %vm506, 0, %v465
        %v513 = vsel %vm506, 0, %v472
        %v514 = vsel %vm506, 0, %v479
        %v515 = vsel %vm506, 0, %v486
        %v516 = vsel %vm506, 0, %v493
        %v517 = vrot.slane %v428, 1
        %v518 = vor.u32 %v425, %v517
        %v519 = vrot.slane %v435, 1
        %v520 = vor.u32 %v432, %v519
        %v521 = vrot.slane %v442, 1
        %v522 = vor.u32 %v439, %v521
        %v523 = vrot.slane %v449, 1
        %v524 = vor.u32 %v446, %v523
        %v525 = vrot.slane %v456, 1
        %v526 = vor.u32 %v453, %v525
        %v527 = vrot.slane %v463, 1
        %v528 = vor.u32 %v460, %v527
        %v529 = vrot.slane %v470, 1
        %v530 = vor.u32 %v467, %v529
        %v531 = vrot.slane %v477, 1
        %v532 = vor.u32 %v474, %v531
        %v533 = vrot.slane %v484, 1
        %v534 = vor.u32 %v481, %v533
        %v535 = vrot.slane %v491, 1
        %v536 = vor.u32 %v488, %v535
        %vm547 = vcmask 1047552
        %vm548 = vsmask.f32 7424
        %vm549 = vmand %vm547, %vm548
        %v550 = vsel %vm549, %v518, 0
        %v551 = vsel %vm549, %v520, 0
        %v552 = vsel %vm549, %v522, 0
        %v553 = vsel %vm549, %v524, 0
        %v554 = vsel %vm549, %v526, 0
        %v555 = vsel %vm549, %v528, 0
        %v556 = vsel %vm549, %v530, 0
        %v557 = vsel %vm549, %v532, 0
        %v558 = vsel %vm549, %v534, 0
        %v559 = vsel %vm549, %v536, 0
        %570 = vrot.lane.b32.xlu0 %v393, 4
        %v571 = vpop.permute.xlu0 %570
        %572 = vrot.lane.b32.xlu0 %v416, 4
        %v573 = vpop.permute.xlu0 %572
        %574 = vrot.lane.b32.xlu0 %v417, 4
        %v575 = vpop.permute.xlu0 %574
        %576 = vrot.lane.b32.xlu0 %v418, 4
        %v577 = vpop.permute.xlu0 %576
        %578 = vrot.lane.b32.xlu0 %v419, 4
        %v579 = vpop.permute.xlu0 %578
        %580 = vrot.lane.b32.xlu0 %v420, 4
        %v581 = vpop.permute.xlu0 %580
        %582 = vrot.lane.b32.xlu0 %v421, 4
        %v583 = vpop.permute.xlu0 %582
        %584 = vrot.lane.b32.xlu0 %v422, 4
        %v585 = vpop.permute.xlu0 %584
        %586 = vrot.lane.b32.xlu0 %v423, 4
        %v587 = vpop.permute.xlu0 %586
        %588 = vrot.lane.b32.xlu0 %v399, 4
        %v589 = vpop.permute.xlu0 %588
        %600 = vrot.lane.b32.xlu0 %v550, 8
        %v601 = vpop.permute.xlu0 %600
        %602 = vrot.lane.b32.xlu0 %v551, 8
        %v603 = vpop.permute.xlu0 %602
        %604 = vrot.lane.b32.xlu0 %v552, 8
        %v605 = vpop.permute.xlu0 %604
        %606 = vrot.lane.b32.xlu0 %v553, 8
        %v607 = vpop.permute.xlu0 %606
        %608 = vrot.lane.b32.xlu0 %v554, 8
        %v609 = vpop.permute.xlu0 %608
        %610 = vrot.lane.b32.xlu0 %v555, 8
        %v611 = vpop.permute.xlu0 %610
        %612 = vrot.lane.b32.xlu0 %v556, 8
        %v613 = vpop.permute.xlu0 %612
        %614 = vrot.lane.b32.xlu0 %v557, 8
        %v615 = vpop.permute.xlu0 %614
        %616 = vrot.lane.b32.xlu0 %v558, 8
        %v617 = vpop.permute.xlu0 %616
        %618 = vrot.lane.b32.xlu0 %v559, 8
        %v619 = vpop.permute.xlu0 %618
        %vm620 = vcmask 31744
        %v623 = vsel %vm620, %v507, %v571
        %v626 = vsel %vm620, %v508, %v573
        %v629 = vsel %vm620, %v509, %v575
        %v632 = vsel %vm620, %v510, %v577
        %v635 = vsel %vm620, %v511, %v579
        %v638 = vsel %vm620, %v512, %v581
        %v641 = vsel %vm620, %v513, %v583
        %v644 = vsel %vm620, %v514, %v585
        %v647 = vsel %vm620, %v515, %v587
        %v650 = vsel %vm620, %v516, %v589
        %vm651 = vcmask 64512
        %v653 = vsel %vm651, %v623, %v601
        %v655 = vsel %vm651, %v626, %v603
        %v657 = vsel %vm651, %v629, %v605
        %v659 = vsel %vm651, %v632, %v607
        %v661 = vsel %vm651, %v635, %v609
        %v663 = vsel %vm651, %v638, %v611
        %v665 = vsel %vm651, %v641, %v613
        %v667 = vsel %vm651, %v644, %v615
        %v669 = vsel %vm651, %v647, %v617
        %v671 = vsel %vm651, %v650, %v619
        %v672 = vld [vmem:[%s3] sm:$0xf]
        %v673 = vld [vmem:[%s3 + $0x4] sm:$0x3]
        %s674 = scalar_lea.vmem %s3, 8
        %v675 = vld [vmem:[%s674] sm:$0xf]
        %v676 = vld [vmem:[%s674 + $0x4] sm:$0x3]
        %v679 = vunpack.c.l.b16 %v675
        %v680 = vunpack.c.l.b16 %v676
        %v681 = vpack.c.b16 %v680, %v679
        %vm682 = vcmask 97280
        %v683 = vsel %vm682, %v655, 0
        %v685 = vsel %vm682, %v657, 0
        %v687 = vsel %vm682, %v659, 0
        %v689 = vsel %vm682, %v661, 0
        %v691 = vsel %vm682, %v663, 0
        %v693 = vsel %vm682, %v665, 0
        %v695 = vsel %vm682, %v667, 0
        %v697 = vsel %vm682, %v669, 0
        %vm699 = vcmask 1045504
        %v701 = vsel %vm699, %v681, 0
        %703 = vmatprep.subr.bf16.mxu0 0
        %704 = vmatpush1.bf16.msra.mxu0 %v701
        %705 = vmatprep.subr.bf16.mxu0 0
        %706 = vmatpush1.bf16.msra.mxu0 0
        %707 = vmatprep.subr.bf16.mxu0 0
        %708 = vmatpush1.bf16.msra.mxu0 0
        %709 = vmatprep.subr.bf16.mxu0 0
        %710 = vmatpush1.bf16.msra.mxu0 0
        %711 = vmatprep.subr.bf16.mxu0 0
        %712 = vmatpush1.bf16.msra.mxu0 0
        %713 = vmatprep.subr.bf16.mxu0 0
        %714 = vmatpush1.bf16.msra.mxu0 0
        %715 = vmatprep.subr.bf16.mxu0 0
        %716 = vmatpush1.bf16.msra.mxu0 0
        %717 = vmatprep.subr.bf16.mxu0 0
        %718 = vmatpush1.bf16.msra.mxu0 0
        %719 = vmatprep.subr.bf16.mxu0 0
        %720 = vmatpush1.bf16.msra.mxu0 0
        %721 = vmatprep.subr.bf16.mxu0 0
        %722 = vmatpush1.bf16.msra.mxu0 0
        %723 = vmatprep.subr.bf16.mxu0 0
        %724 = vmatpush1.bf16.msra.mxu0 0
        %725 = vmatprep.subr.bf16.mxu0 0
        %726 = vmatpush1.bf16.msra.mxu0 0
        %727 = vmatprep.subr.bf16.mxu0 0
        %728 = vmatpush1.bf16.msra.mxu0 0
        %729 = vmatprep.subr.bf16.mxu0 0
        %730 = vmatpush1.bf16.msra.mxu0 0
        %731 = vmatprep.subr.bf16.mxu0 0
        %732 = vmatpush1.bf16.msra.mxu0 0
        %733 = vmatprep.subr.bf16.mxu0 0
        %734 = vmatpush1.bf16.msra.mxu0 0
        %735 = vmatprep.mubr.bf16.mxu0 0
        %736 = vmatmul.mubr.bf16.gmra.mrb[0].mxu0 %v683
        %v737 = vpop.f32.mrb[0].mxu0
        %v738 = vadd.f32 0.0, %v737
        %v739 = vpop.f32.mrb[0].mxu0
        %v740 = vpop.f32.mrb[0].mxu0
        %v741 = vadd.f32 0.0, %v740
        %v742 = vpop.f32.mrb[0].mxu0
        %743 = vmatprep.mubr.bf16.mxu0 0
        %744 = vmatmul.mubr.bf16.gmra.mrb[0].mxu0 %v685
        %v745 = vpop.f32.mrb[0].mxu0
        %v746 = vadd.f32 0.0, %v745
        %v747 = vpop.f32.mrb[0].mxu0
        %v748 = vpop.f32.mrb[0].mxu0
        %v749 = vadd.f32 0.0, %v748
        %v750 = vpop.f32.mrb[0].mxu0
        %751 = vmatprep.mubr.bf16.mxu0 0
        %752 = vmatmul.mubr.bf16.gmra.mrb[0].mxu0 %v687
        %v753 = vpop.f32.mrb[0].mxu0
        %v754 = vadd.f32 0.0, %v753
        %v755 = vpop.f32.mrb[0].mxu0
        %v756 = vpop.f32.mrb[0].mxu0
        %v757 = vadd.f32 0.0, %v756
        %v758 = vpop.f32.mrb[0].mxu0
        %759 = vmatprep.mubr.bf16.mxu0 0
        %760 = vmatmul.mubr.bf16.gmra.mrb[0].mxu0 %v689
        %v761 = vpop.f32.mrb[0].mxu0
        %v762 = vadd.f32 0.0, %v761
        %v763 = vpop.f32.mrb[0].mxu0
        %v764 = vpop.f32.mrb[0].mxu0
        %v765 = vadd.f32 0.0, %v764
        %v766 = vpop.f32.mrb[0].mxu0
        %767 = vmatprep.mubr.bf16.mxu0 0
        %768 = vmatmul.mubr.bf16.gmra.mrb[0].mxu0 %v691
        %v769 = vpop.f32.mrb[0].mxu0
        %v770 = vadd.f32 0.0, %v769
        %v771 = vpop.f32.mrb[0].mxu0
        %v772 = vpop.f32.mrb[0].mxu0
        %v773 = vadd.f32 0.0, %v772
        %v774 = vpop.f32.mrb[0].mxu0
        %775 = vmatprep.mubr.bf16.mxu0 0
        %776 = vmatmul.mubr.bf16.gmra.mrb[0].mxu0 %v693
        %v777 = vpop.f32.mrb[0].mxu0
        %v778 = vadd.f32 0.0, %v777
        %v779 = vpop.f32.mrb[0].mxu0
        %v780 = vpop.f32.mrb[0].mxu0
        %v781 = vadd.f32 0.0, %v780
        %v782 = vpop.f32.mrb[0].mxu0
        %783 = vmatprep.mubr.bf16.mxu0 0
        %784 = vmatmul.mubr.bf16.gmra.mrb[0].mxu0 %v695
        %v785 = vpop.f32.mrb[0].mxu0
        %v786 = vadd.f32 0.0, %v785
        %v787 = vpop.f32.mrb[0].mxu0
        %v788 = vpop.f32.mrb[0].mxu0
        %v789 = vadd.f32 0.0, %v788
        %v790 = vpop.f32.mrb[0].mxu0
        %791 = vmatprep.mubr.bf16.mxu0 0
        %792 = vmatmul.mubr.bf16.gmra.mrb[0].mxu0 %v697
        %v793 = vpop.f32.mrb[0].mxu0
        %v794 = vadd.f32 0.0, %v793
        %v795 = vpop.f32.mrb[0].mxu0
        %v796 = vpop.f32.mrb[0].mxu0
        %v797 = vadd.f32 0.0, %v796
        %v798 = vpop.f32.mrb[0].mxu0
        %799 = vdwg.mxu0
        %v802 = vunpack.c.l.b16 %v672
        %v803 = vunpack.c.l.b16 %v673
        %v804 = vpack.c.b16 %v803, %v802
        %v805 = vsel %vm682, %v653, 0
        %v808 = vsel %vm699, %v804, 0
        %810 = vmatprep.subr.bf16.mxu0 0
        %811 = vmatpush1.bf16.msra.mxu0 %v808
        %812 = vmatprep.subr.bf16.mxu0 0
        %813 = vmatpush1.bf16.msra.mxu0 0
        %814 = vmatprep.subr.bf16.mxu0 0
        %815 = vmatpush1.bf16.msra.mxu0 0
        %816 = vmatprep.subr.bf16.mxu0 0
        %817 = vmatpush1.bf16.msra.mxu0 0
        %818 = vmatprep.subr.bf16.mxu0 0
        %819 = vmatpush1.bf16.msra.mxu0 0
        %820 = vmatprep.subr.bf16.mxu0 0
        %821 = vmatpush1.bf16.msra.mxu0 0
        %822 = vmatprep.subr.bf16.mxu0 0
        %823 = vmatpush1.bf16.msra.mxu0 0
        %824 = vmatprep.subr.bf16.mxu0 0
        %825 = vmatpush1.bf16.msra.mxu0 0
        %826 = vmatprep.subr.bf16.mxu0 0
        %827 = vmatpush1.bf16.msra.mxu0 0
        %828 = vmatprep.subr.bf16.mxu0 0
        %829 = vmatpush1.bf16.msra.mxu0 0
        %830 = vmatprep.subr.bf16.mxu0 0
        %831 = vmatpush1.bf16.msra.mxu0 0
        %832 = vmatprep.subr.bf16.mxu0 0
        %833 = vmatpush1.bf16.msra.mxu0 0
        %834 = vmatprep.subr.bf16.mxu0 0
        %835 = vmatpush1.bf16.msra.mxu0 0
        %836 = vmatprep.subr.bf16.mxu0 0
        %837 = vmatpush1.bf16.msra.mxu0 0
        %838 = vmatprep.subr.bf16.mxu0 0
        %839 = vmatpush1.bf16.msra.mxu0 0
        %840 = vmatprep.subr.bf16.mxu0 0
        %841 = vmatpush1.bf16.msra.mxu0 0
        %842 = vmatprep.mubr.bf16.mxu0 0
        %843 = vmatmul.mubr.bf16.gmra.mrb[0].mxu0 %v805
        %v844 = vpop.f32.mrb[0].mxu0
        %v845 = vadd.f32 %v738, %v844
        %v846 = vpop.f32.mrb[0].mxu0
        %v847 = vpop.f32.mrb[0].mxu0
        %v848 = vadd.f32 %v741, %v847
        %v849 = vpop.f32.mrb[0].mxu0
        %850 = vmatprep.mubr.bf16.mxu0 0
        %851 = vmatmul.mubr.bf16.gmra.mrb[0].mxu0 %v683
        %v852 = vpop.f32.mrb[0].mxu0
        %v853 = vadd.f32 %v746, %v852
        %v854 = vpop.f32.mrb[0].mxu0
        %v855 = vpop.f32.mrb[0].mxu0
        %v856 = vadd.f32 %v749, %v855
        %v857 = vpop.f32.mrb[0].mxu0
        %858 = vmatprep.mubr.bf16.mxu0 0
        %859 = vmatmul.mubr.bf16.gmra.mrb[0].mxu0 %v685
        %v860 = vpop.f32.mrb[0].mxu0
        %v861 = vadd.f32 %v754, %v860
        %v862 = vpop.f32.mrb[0].mxu0
        %v863 = vpop.f32.mrb[0].mxu0
        %v864 = vadd.f32 %v757, %v863
        %v865 = vpop.f32.mrb[0].mxu0
        %866 = vmatprep.mubr.bf16.mxu0 0
        %867 = vmatmul.mubr.bf16.gmra.mrb[0].mxu0 %v687
        %v868 = vpop.f32.mrb[0].mxu0
        %v869 = vadd.f32 %v762, %v868
        %v870 = vpop.f32.mrb[0].mxu0
        %v871 = vpop.f32.mrb[0].mxu0
        %v872 = vadd.f32 %v765, %v871
        %v873 = vpop.f32.mrb[0].mxu0
        %874 = vmatprep.mubr.bf16.mxu0 0
        %875 = vmatmul.mubr.bf16.gmra.mrb[0].mxu0 %v689
        %v876 = vpop.f32.mrb[0].mxu0
        %v877 = vadd.f32 %v770, %v876
        %v878 = vpop.f32.mrb[0].mxu0
        %v879 = vpop.f32.mrb[0].mxu0
        %v880 = vadd.f32 %v773, %v879
        %v881 = vpop.f32.mrb[0].mxu0
        %882 = vmatprep.mubr.bf16.mxu0 0
        %883 = vmatmul.mubr.bf16.gmra.mrb[0].mxu0 %v691
        %v884 = vpop.f32.mrb[0].mxu0
        %v885 = vadd.f32 %v778, %v884
        %v886 = vpop.f32.mrb[0].mxu0
        %v887 = vpop.f32.mrb[0].mxu0
        %v888 = vadd.f32 %v781, %v887
        %v889 = vpop.f32.mrb[0].mxu0
        %890 = vmatprep.mubr.bf16.mxu0 0
        %891 = vmatmul.mubr.bf16.gmra.mrb[0].mxu0 %v693
        %v892 = vpop.f32.mrb[0].mxu0
        %v893 = vadd.f32 %v786, %v892
        %v894 = vpop.f32.mrb[0].mxu0
        %v895 = vpop.f32.mrb[0].mxu0
        %v896 = vadd.f32 %v789, %v895
        %v897 = vpop.f32.mrb[0].mxu0
        %898 = vmatprep.mubr.bf16.mxu0 0
        %899 = vmatmul.mubr.bf16.gmra.mrb[0].mxu0 %v695
        %v900 = vpop.f32.mrb[0].mxu0
        %v901 = vadd.f32 %v794, %v900
        %v902 = vpop.f32.mrb[0].mxu0
        %v903 = vpop.f32.mrb[0].mxu0
        %v904 = vadd.f32 %v797, %v903
        %v905 = vpop.f32.mrb[0].mxu0
        %906 = vdwg.mxu0
        %s907 = scalar_lea.vmem %s3, 16
        %v908 = vld [vmem:[%s907] sm:$0xf]
        %v909 = vld [vmem:[%s907 + $0x4] sm:$0x3]
        %v912 = vunpack.c.l.b16 %v908
        %v913 = vunpack.c.l.b16 %v909
        %v914 = vpack.c.b16 %v913, %v912
        %v915 = vsel %vm682, %v671, 0
        %v918 = vsel %vm699, %v914, 0
        %920 = vmatprep.subr.bf16.mxu0 0
        %921 = vmatpush1.bf16.msra.mxu0 %v918
        %922 = vmatprep.subr.bf16.mxu0 0
        %923 = vmatpush1.bf16.msra.mxu0 0
        %924 = vmatprep.subr.bf16.mxu0 0
        %925 = vmatpush1.bf16.msra.mxu0 0
        %926 = vmatprep.subr.bf16.mxu0 0
        %927 = vmatpush1.bf16.msra.mxu0 0
        %928 = vmatprep.subr.bf16.mxu0 0
        %929 = vmatpush1.bf16.msra.mxu0 0
        %930 = vmatprep.subr.bf16.mxu0 0
        %931 = vmatpush1.bf16.msra.mxu0 0
        %932 = vmatprep.subr.bf16.mxu0 0
        %933 = vmatpush1.bf16.msra.mxu0 0
        %934 = vmatprep.subr.bf16.mxu0 0
        %935 = vmatpush1.bf16.msra.mxu0 0
        %936 = vmatprep.subr.bf16.mxu0 0
        %937 = vmatpush1.bf16.msra.mxu0 0
        %938 = vmatprep.subr.bf16.mxu0 0
        %939 = vmatpush1.bf16.msra.mxu0 0
        %940 = vmatprep.subr.bf16.mxu0 0
        %941 = vmatpush1.bf16.msra.mxu0 0
        %942 = vmatprep.subr.bf16.mxu0 0
        %943 = vmatpush1.bf16.msra.mxu0 0
        %944 = vmatprep.subr.bf16.mxu0 0
        %945 = vmatpush1.bf16.msra.mxu0 0
        %946 = vmatprep.subr.bf16.mxu0 0
        %947 = vmatpush1.bf16.msra.mxu0 0
        %948 = vmatprep.subr.bf16.mxu0 0
        %949 = vmatpush1.bf16.msra.mxu0 0
        %950 = vmatprep.subr.bf16.mxu0 0
        %951 = vmatpush1.bf16.msra.mxu0 0
        %952 = vmatprep.mubr.bf16.mxu0 0
        %953 = vmatmul.mubr.bf16.gmra.mrb[0].mxu0 %v685
        %v954 = vpop.f32.mrb[0].mxu0
        %v955 = vadd.f32 0.0, %v954
        %v956 = vpop.f32.mrb[0].mxu0
        %v957 = vpop.f32.mrb[0].mxu0
        %v958 = vadd.f32 0.0, %v957
        %v959 = vpop.f32.mrb[0].mxu0
        %960 = vmatprep.mubr.bf16.mxu0 0
        %961 = vmatmul.mubr.bf16.gmra.mrb[0].mxu0 %v687
        %v962 = vpop.f32.mrb[0].mxu0
        %v963 = vadd.f32 0.0, %v962
        %v964 = vpop.f32.mrb[0].mxu0
        %v965 = vpop.f32.mrb[0].mxu0
        %v966 = vadd.f32 0.0, %v965
        %v967 = vpop.f32.mrb[0].mxu0
        %968 = vmatprep.mubr.bf16.mxu0 0
        %969 = vmatmul.mubr.bf16.gmra.mrb[0].mxu0 %v689
        %v970 = vpop.f32.mrb[0].mxu0
        %v971 = vadd.f32 0.0, %v970
        %v972 = vpop.f32.mrb[0].mxu0
        %v973 = vpop.f32.mrb[0].mxu0
        %v974 = vadd.f32 0.0, %v973
        %v975 = vpop.f32.mrb[0].mxu0
        %976 = vmatprep.mubr.bf16.mxu0 0
        %977 = vmatmul.mubr.bf16.gmra.mrb[0].mxu0 %v691
        %v978 = vpop.f32.mrb[0].mxu0
        %v979 = vadd.f32 0.0, %v978
        %v980 = vpop.f32.mrb[0].mxu0
        %v981 = vpop.f32.mrb[0].mxu0
        %v982 = vadd.f32 0.0, %v981
        %v983 = vpop.f32.mrb[0].mxu0
        %984 = vmatprep.mubr.bf16.mxu0 0
        %985 = vmatmul.mubr.bf16.gmra.mrb[0].mxu0 %v693
        %v986 = vpop.f32.mrb[0].mxu0
        %v987 = vadd.f32 0.0, %v986
        %v988 = vpop.f32.mrb[0].mxu0
        %v989 = vpop.f32.mrb[0].mxu0
        %v990 = vadd.f32 0.0, %v989
        %v991 = vpop.f32.mrb[0].mxu0
        %992 = vmatprep.mubr.bf16.mxu0 0
        %993 = vmatmul.mubr.bf16.gmra.mrb[0].mxu0 %v695
        %v994 = vpop.f32.mrb[0].mxu0
        %v995 = vadd.f32 0.0, %v994
        %v996 = vpop.f32.mrb[0].mxu0
        %v997 = vpop.f32.mrb[0].mxu0
        %v998 = vadd.f32 0.0, %v997
        %v999 = vpop.f32.mrb[0].mxu0
        %1000 = vmatprep.mubr.bf16.mxu0 0
        %1001 = vmatmul.mubr.bf16.gmra.mrb[0].mxu0 %v697
        %v1002 = vpop.f32.mrb[0].mxu0
        %v1003 = vadd.f32 0.0, %v1002
        %v1004 = vpop.f32.mrb[0].mxu0
        %v1005 = vpop.f32.mrb[0].mxu0
        %v1006 = vadd.f32 0.0, %v1005
        %v1007 = vpop.f32.mrb[0].mxu0
        %1008 = vmatprep.mubr.bf16.mxu0 0
        %1009 = vmatmul.mubr.bf16.gmra.mrb[0].mxu0 %v915
        %v1010 = vpop.f32.mrb[0].mxu0
        %v1011 = vadd.f32 0.0, %v1010
        %v1012 = vpop.f32.mrb[0].mxu0
        %v1013 = vpop.f32.mrb[0].mxu0
        %v1014 = vadd.f32 0.0, %v1013
        %v1015 = vpop.f32.mrb[0].mxu0
        %1016 = vdwg.mxu0
        %v1017 = vadd.f32 %v845, %v955
        %v1018 = vadd.f32 %v848, %v958
        %v1019 = vadd.f32 %v853, %v963
        %v1020 = vadd.f32 %v856, %v966
        %v1021 = vadd.f32 %v861, %v971
        %v1022 = vadd.f32 %v864, %v974
        %v1023 = vadd.f32 %v869, %v979
        %v1024 = vadd.f32 %v872, %v982
        %v1025 = vadd.f32 %v877, %v987
        %v1026 = vadd.f32 %v880, %v990
        %v1027 = vadd.f32 %v885, %v995
        %v1028 = vadd.f32 %v888, %v998
        %v1029 = vadd.f32 %v893, %v1003
        %v1030 = vadd.f32 %v896, %v1006
        %v1031 = vadd.f32 %v901, %v1011
        %v1032 = vadd.f32 %v904, %v1014
        %v1033 = vld [vmem:[%s4] sm:$0x1]
        %v1035 = vlaneseq
        %v1036 = vshrl.u32 %v1035, 7
        %v1037 = vsub.s32 0, %v1036
        %v1038 = vrot.slane %v1033, %v1037
        %v1040 = vadd.f32 %v1017, %v1038
        %v1041 = vadd.f32 %v1018, %v1038
        %v1042 = vadd.f32 %v1019, %v1038
        %v1043 = vadd.f32 %v1020, %v1038
        %v1044 = vadd.f32 %v1021, %v1038
        %v1045 = vadd.f32 %v1022, %v1038
        %v1046 = vadd.f32 %v1023, %v1038
        %v1047 = vadd.f32 %v1024, %v1038
        %v1048 = vadd.f32 %v1025, %v1038
        %v1049 = vadd.f32 %v1026, %v1038
        %v1050 = vadd.f32 %v1027, %v1038
        %v1051 = vadd.f32 %v1028, %v1038
        %v1052 = vadd.f32 %v1029, %v1038
        %v1053 = vadd.f32 %v1030, %v1038
        %v1054 = vadd.f32 %v1031, %v1038
        %v1055 = vadd.f32 %v1032, %v1038
        %v1056 = vlaneseq
        %v1057 = vand.u32 %v1056, 127
        %vm1058 = vcmp.ge.s32.totalorder %v1057, 4
        %v1059 = vmax.f32 %v1040, 0.0
        %v1060 = vmax.f32 %v1041, 0.0
        %v1061 = vmax.f32 %v1042, 0.0
        %v1062 = vmax.f32 %v1043, 0.0
        %v1063 = vmax.f32 %v1044, 0.0
        %v1064 = vmax.f32 %v1045, 0.0
        %v1065 = vmax.f32 %v1046, 0.0
        %v1066 = vmax.f32 %v1047, 0.0
        %v1067 = vmax.f32 %v1048, 0.0
        %v1068 = vmax.f32 %v1049, 0.0
        %v1069 = vmax.f32 %v1050, 0.0
        %v1070 = vmax.f32 %v1051, 0.0
        %v1071 = vmax.f32 %v1052, 0.0
        %v1072 = vmax.f32 %v1053, 0.0
        %v1073 = vmax.f32 %v1054, 0.0
        %v1074 = vmax.f32 %v1055, 0.0
        %v1075 = vsel %vm1058, %v1059, %v1040
        %v1076 = vsel %vm1058, %v1060, %v1041
        %v1077 = vsel %vm1058, %v1061, %v1042
        %v1078 = vsel %vm1058, %v1062, %v1043
        %v1079 = vsel %vm1058, %v1063, %v1044
        %v1080 = vsel %vm1058, %v1064, %v1045
        %v1081 = vsel %vm1058, %v1065, %v1046
        %v1082 = vsel %vm1058, %v1066, %v1047
        %v1083 = vsel %vm1058, %v1067, %v1048
        %v1084 = vsel %vm1058, %v1068, %v1049
        %v1085 = vsel %vm1058, %v1069, %v1050
        %v1086 = vsel %vm1058, %v1070, %v1051
        %v1087 = vsel %vm1058, %v1071, %v1052
        %v1088 = vsel %vm1058, %v1072, %v1053
        %v1089 = vsel %vm1058, %v1073, %v1054
        %v1090 = vsel %vm1058, %v1074, %v1055
        %1091 = vst [vmem:[%s334] sm:$0xff] %v1075
        %1092 = vst [vmem:[%s334 + $0x8] sm:$0xff] %v1076
        %1093 = vst [vmem:[%s334 + $0x10] sm:$0xff] %v1077
        %1094 = vst [vmem:[%s334 + $0x18] sm:$0xff] %v1078
        %1095 = vst [vmem:[%s334 + $0x20] sm:$0xff] %v1079
        %1096 = vst [vmem:[%s334 + $0x28] sm:$0xff] %v1080
        %1097 = vst [vmem:[%s334 + $0x30] sm:$0xff] %v1081
        %1098 = vst [vmem:[%s334 + $0x38] sm:$0xff] %v1082
        %1099 = vst [vmem:[%s334 + $0x40] sm:$0xff] %v1083
        %1100 = vst [vmem:[%s334 + $0x48] sm:$0xff] %v1084
        %1101 = vst [vmem:[%s334 + $0x50] sm:$0xff] %v1085
        %1102 = vst [vmem:[%s334 + $0x58] sm:$0xff] %v1086
        %1103 = vst [vmem:[%s334 + $0x60] sm:$0xff] %v1087
        %1104 = vst [vmem:[%s334 + $0x68] sm:$0xff] %v1088
        %1105 = vst [vmem:[%s334 + $0x70] sm:$0xff] %v1089
        %1106 = vst [vmem:[%s334 + $0x78] sm:$0xff] %v1090
        %s1107 = sand.u32 %s183, 1
        %s1108 = scalar_lea.sflag [#allocation3], %s1107
        %s1109 = sand.u32 %s183, 1
        %s1110 = smul.addr %s1109, 128
        %s1111 = scalar_lea.vmem [#allocation2], %s1110
        // Predicated region
        $region41: #{tpu_custom_call.1} parent=39 // pred_check
          %p1112 = pneg %p193
        $region42: #{tpu_custom_call.1} parent=39 // pred_check_branch
          %1114 = sbr.rel (%p1112) target = $region44
        $region43: #{tpu_custom_call.1} parent=39 // pred_region
          %s1115 = smul.u32 8, %s24
          %s1117 = ssub.s32 2048, 2048
          %1118 = vsyncadd %s1108, %s1117
          %s1119 = smul.addr %s1115, 2
          %s1120 = smul.addr %s23, 32
          %s1121 = sadd.s32 %s1119, %s1120
          %s1122 = smul.addr %s1121, 128
          %s1123 = scalar_lea.hbm %s5, %s1122
          %s1124 = sshll.u32 %s1111, 4
          %s1125 = int_to_ptr.vmem [resolvable:$true] %s1124
          %1130 = dma.vmem_to_hbm [thread:$0]  %s1125, 2048, %s1123, %s1108, 128, 128, 8
        $region44: #{tpu_custom_call.1} parent=39 // pred_fallthru
          _
      $region40: #{tpu_custom_call.1} parent=5 // pred_fallthru
        _
      %p1131 = scmp.le.s32.totalorder 2, %s14
      // Predicated region
      $region45: #{tpu_custom_call.1} parent=5 // pred_check
        %p1132 = pneg %p1131
      $region46: #{tpu_custom_call.1} parent=5 // pred_check_branch
        %1134 = sbr.rel (%p1132) target = $region48
      $region47: #{tpu_custom_call.1} parent=5 // pred_region
        %s1135 = ssub.s32 %s14, 2
        // Predicated region
        $region49: #{tpu_custom_call.1} parent=47 // pred_check
          %p1136 = pneg %p199
        $region50: #{tpu_custom_call.1} parent=47 // pred_check_branch
          %1138 = sbr.rel (%p1136) target = $region52
        $region51: #{tpu_custom_call.1} parent=47 // pred_region
          %s1139 = sand.u32 %s184, 1
          %s1140 = scalar_lea.sflag [#allocation3], %s1139
          %s1141 = sand.u32 %s184, 1
          %s1142 = smul.addr %s1141, 128
          %s1143 = scalar_lea.vmem [#allocation2], %s1142
          %1144 = dma.done %s1140, 2048
        $region52: #{tpu_custom_call.1} parent=47 // pred_fallthru
          _
      $region48: #{tpu_custom_call.1} parent=5 // pred_fallthru
        _
    $region6: #{tpu_custom_call.1} parent=1 // loop_footer
      %s18 = sadd.s32 1, %s14
    $region7: #{tpu_custom_call.1} parent=1 // loop_footer_branch
      %13 = sbr.rel target = $region3
    $region8: #{tpu_custom_call.1} parent=1 // loop_exit
      _
    %1145 = vsyncpa [#allocation3], 1
    %s1146 = scalar_lea.sflag [#allocation3], 1
    %1147 = vsyncpa %s1146, 1

</llo_original>
